<compile_context>
chip_gen: v5e
topology: v5e:2x2
jax: 0.10.0
libtpu: 0.0.40
codegen_flags: <defaults>
</compile_context>

<pallas_src>
import jax
import jax.numpy as jnp
from jax.experimental import pallas as pl
from jax.experimental.pallas import tpu as pltpu


def _mat_gru_seq_kernel(x_ref, q0_ref, p_ref, out_ref, q_sc, xw_sc):
    """One grid step of the hoisted mat_GRU_cell recurrence (transposed layout).

    x_ref   : (T*C, R)       all T attens, transposed & row-stacked
    q0_ref  : (C, R)         initial prev_Q^T
    p_ref   : (2R + C, 3R)   [[Wu^T Wr^T Wh^T], [Uu^T Ur^T Uh^T], [bu^T br^T bh^T]]
    out_ref : (T, C, R)      Q^T after every step (VMEM-resident, flushed once)
    q_sc    : (C, R)  f32    carried Q^T
    xw_sc   : (T*C, 3R) f32  cached x-dependent gate pre-activations
    """
    t = pl.program_id(0)
    cols, rows = q0_ref.shape

    @pl.when(t == 0)
    def _init():
        # Carried state (kept in f32 for the gate math).
        q_sc[...] = q0_ref[...].astype(jnp.float32)
        # Pre-batch the x-dependent half of all T steps in one MXU pass:
        # (T*C, R) @ (R, 3R) -> [Wu x | Wr x | Wh x]^T for every step.
        w_t = p_ref[0:rows, :].astype(jnp.float32)
        xw_sc[...] = jnp.dot(x_ref[...].astype(jnp.float32), w_t,
                             preferred_element_type=jnp.float32)

    h_t = q_sc[...]                                           # (C, R)
    u_t = p_ref[rows:2 * rows, :].astype(jnp.float32)         # [Uu^T|Ur^T|Uh^T]
    bias_t = p_ref[2 * rows:, :].astype(jnp.float32)          # (C, 3R)

    start = pl.multiple_of(t * cols, cols)
    pre_x = xw_sc[pl.ds(start, cols), :] + bias_t             # (C, 3R)

    # h-dependent update/reset half: (C, R) @ (R, 2R) on the MXU.
    pre_h = jnp.dot(h_t, u_t[:, 0:2 * rows],
                    preferred_element_type=jnp.float32)       # (C, 2R)

    upd = jax.nn.sigmoid(pre_x[:, 0:rows] + pre_h[:, 0:rows])           # update
    rst = jax.nn.sigmoid(pre_x[:, rows:2 * rows] + pre_h[:, rows:2 * rows])  # reset

    h_cap = rst * h_t
    h_til = jnp.tanh(pre_x[:, 2 * rows:]
                     + jnp.dot(h_cap, u_t[:, 2 * rows:],
                               preferred_element_type=jnp.float32))

    new_q = (1.0 - upd) * h_t + upd * h_til                   # (C, R), f32
    q_sc[...] = new_q
    out_ref[t] = new_q.astype(out_ref.dtype)


def pack_params(params):
    """Pack the 9 per-gate parameters into one (2R + C, 3R) block (done once).

    Layout (transposed, gates stacked along lanes):
      rows [0, R)     : [Wu^T | Wr^T | Wh^T]
      rows [R, 2R)    : [Uu^T | Ur^T | Uh^T]
      rows [2R, 2R+C) : [bu^T | br^T | bh^T]
    """
    w_t = jnp.concatenate([params["Wu"].T, params["Wr"].T, params["Wh"].T], axis=1)
    u_t = jnp.concatenate([params["Uu"].T, params["Ur"].T, params["Uh"].T], axis=1)
    b_t = jnp.concatenate([params["bu"].T, params["br"].T, params["bh"].T], axis=1)
    return {"P": jnp.concatenate([w_t, u_t, b_t], axis=0)}


@jax.jit
def mat_gru_cell_seq(packed, atten_seq, prev_Q):
    """Run the mat_GRU_cell recurrence over T steps in ONE Pallas kernel.

    atten_seq: (T, rows, cols); prev_Q: (rows, cols).
    Returns (T, rows, cols): Q after each step.
    """
    T, rows, cols = atten_seq.shape
    # One amortized layout conversion for the WHOLE sequence (not per step).
    x2d = jnp.swapaxes(atten_seq, 1, 2).reshape(T * cols, rows)   # (T*C, R)
    q0_t = prev_Q.T                                               # (C, R)

    out_t = pl.pallas_call(
        _mat_gru_seq_kernel,
        out_shape=jax.ShapeDtypeStruct((T, cols, rows), prev_Q.dtype),
        grid_spec=pltpu.PrefetchScalarGridSpec(
            num_scalar_prefetch=0,
            grid=(T,),
            in_specs=[
                # All inputs are full-array, VMEM-resident blocks (constant
                # index_map) -> DMA'd once for the whole recurrence.
                pl.BlockSpec((T * cols, rows), lambda t: (0, 0)),
                pl.BlockSpec((cols, rows), lambda t: (0, 0)),
                pl.BlockSpec((2 * rows + cols, 3 * rows), lambda t: (0, 0)),
            ],
            # Output is resident across the whole grid (constant block index)
            # and written back to HBM once at the end: O(1) writeback, not O(T).
            out_specs=pl.BlockSpec((T, cols, rows), lambda t: (0, 0, 0)),
            scratch_shapes=[
                pltpu.VMEM((cols, rows), jnp.float32),            # carried Q^T
                pltpu.VMEM((T * cols, 3 * rows), jnp.float32),    # cached W@x
            ],
        ),
        compiler_params=pltpu.CompilerParams(
            dimension_semantics=("arbitrary",)),
    )(x2d, q0_t, packed["P"])

    return jnp.swapaxes(out_t, 1, 2)                              # (T, rows, cols)


@jax.jit
def mat_gru_cell(packed, atten, prev_Q):
    """Single-step forward matching mat_GRU_cell.forward(atten, prev_Q)."""
    return mat_gru_cell_seq(packed, atten[None], prev_Q)[0]


def _orthogonal(key, n, dtype=jnp.float32):
    """Deterministic orthogonal init (QR of a Gaussian), mimics nn.init.orthogonal_."""
    a = jax.random.normal(key, (n, n), dtype=jnp.float32)
    q, r = jnp.linalg.qr(a)
    s = jnp.sign(jnp.diag(r))
    s = jnp.where(s == 0, 1.0, s)
    q = q * s[None, :]
    return q.astype(dtype)


def init_params(key, rows, cols, dtype=jnp.float32):
    ks = jax.random.split(key, 6)
    zeros_b = jnp.zeros((rows, cols), dtype=dtype)
    return {
        "Wu": _orthogonal(ks[0], rows, dtype), "Uu": _orthogonal(ks[1], rows, dtype),
        "bu": zeros_b,
        "Wr": _orthogonal(ks[2], rows, dtype), "Ur": _orthogonal(ks[3], rows, dtype),
        "br": zeros_b,
        "Wh": _orthogonal(ks[4], rows, dtype), "Uh": _orthogonal(ks[5], rows, dtype),
        "bh": zeros_b,
    }


def _reference_step(params, atten, prev_Q):
    """Pure-JAX reference mirroring the PyTorch forward (one step)."""
    sig = jax.nn.sigmoid
    upd = sig(params["Wu"] @ atten + params["Uu"] @ prev_Q + params["bu"])
    rst = sig(params["Wr"] @ atten + params["Ur"] @ prev_Q + params["br"])
    h_cap = rst * prev_Q
    h_til = jnp.tanh(params["Wh"] @ atten + params["Uh"] @ h_cap + params["bh"])
    return (1.0 - upd) * prev_Q + upd * h_til


def _reference_seq(params, atten_seq, prev_Q):
    outs = []
    q = prev_Q
    for t in range(atten_seq.shape[0]):
        q = _reference_step(params, atten_seq[t], q)
        outs.append(q)
    return jnp.stack(outs, axis=0)


if __name__ == "__main__":
    rows, cols, T = 32, 16, 8   # args.rows, args.cols; T EvolveGCN timesteps

    key = jax.random.PRNGKey(0)
    kp, kx, kh = jax.random.split(key, 3)

    params = init_params(kp, rows, cols)
    packed = pack_params(params)
    atten_seq = jax.random.normal(kx, (T, rows, cols), dtype=jnp.float32)
    prev_Q = jax.random.normal(kh, (rows, cols), dtype=jnp.float32)

    # Hoisted T-step recurrence: one pallas_call for the whole sequence.
    out_seq = jax.block_until_ready(mat_gru_cell_seq(packed, atten_seq, prev_Q))
    assert out_seq.shape == (T, rows, cols)

    ref_seq = _reference_seq(params, atten_seq, prev_Q)
    # Fused/re-associated contractions + T-step accumulation -> slightly
    # looser f32 tolerance.
    assert jnp.allclose(out_seq, ref_seq, atol=2e-3, rtol=2e-3), "seq mismatch"

    # Single-step forward (the original module's signature).
    new_Q = jax.block_until_ready(mat_gru_cell(packed, atten_seq[0], prev_Q))
    ref_1 = _reference_step(params, atten_seq[0], prev_Q)
    assert new_Q.shape == (rows, cols)
    assert jnp.allclose(new_Q, ref_1, atol=1e-3, rtol=1e-3), "single-step mismatch"

    print("KERNEL_OK")
</pallas_src>

<mosaic_0001>
module attributes {stable_mosaic.version = 11 : i64} {
  func.func @_mat_gru_seq_kernel(%arg0: i32, %arg1: memref<128x32xf32, #tpu.memory_space<vmem>>, %arg2: memref<16x32xf32, #tpu.memory_space<vmem>>, %arg3: memref<80x96xf32, #tpu.memory_space<vmem>>, %arg4: memref<8x16x32xf32, #tpu.memory_space<vmem>>, %arg5: memref<16x32xf32, #tpu.memory_space<vmem>>, %arg6: memref<128x96xf32, #tpu.memory_space<vmem>>) attributes {dimension_semantics = [#tpu.dimension_semantics<arbitrary>], iteration_bounds = array<i64: 8>, scalar_prefetch = 0 : i64, scratch_operands = 2 : i64, tpu.core_type = #tpu.core_type<tc>, window_params = [{pipeline_mode = #tpu.pipeline_mode<synchronous>, transform_indices = @transform_0, window_bounds = array<i64: 128, 32>}, {pipeline_mode = #tpu.pipeline_mode<synchronous>, transform_indices = @transform_1, window_bounds = array<i64: 16, 32>}, {pipeline_mode = #tpu.pipeline_mode<synchronous>, transform_indices = @transform_2, window_bounds = array<i64: 80, 96>}, {pipeline_mode = #tpu.pipeline_mode<synchronous>, transform_indices = @transform_3, window_bounds = array<i64: 8, 16, 32>}]} {
    %c0_i32 = arith.constant 0 : i32
    %0 = arith.cmpi eq, %arg0, %c0_i32 : i32
    %1 = arith.extui %0 : i1 to i32
    %c0_i32_0 = arith.constant 0 : i32
    %2 = arith.cmpi ne, %1, %c0_i32_0 : i32
    scf.if %2 {
      %c0_13 = arith.constant 0 : index
      %c0_14 = arith.constant 0 : index
      %45 = vector.load %arg2[%c0_13, %c0_14] : memref<16x32xf32, #tpu.memory_space<vmem>>, vector<16x32xf32>
      %c0_15 = arith.constant 0 : index
      %c0_16 = arith.constant 0 : index
      %46 = vector.load %arg5[%c0_15, %c0_16] : memref<16x32xf32, #tpu.memory_space<vmem>>, vector<16x32xf32>
      tpu.vector_store %arg5[%c0_15, %c0_16], %45 {strides = array<i32>} : memref<16x32xf32, #tpu.memory_space<vmem>>, vector<16x32xf32>,
      %c0_17 = arith.constant 0 : index
      %c0_18 = arith.constant 0 : index
      %47 = vector.load %arg3[%c0_17, %c0_18] : memref<80x96xf32, #tpu.memory_space<vmem>>, vector<32x96xf32>
      %c0_19 = arith.constant 0 : index
      %c0_20 = arith.constant 0 : index
      %48 = vector.load %arg1[%c0_19, %c0_20] : memref<128x32xf32, #tpu.memory_space<vmem>>, vector<128x32xf32>
      %cst_21 = arith.constant dense<0.000000e+00> : vector<128x96xf32>
      %49 = tpu.matmul %48, %47, %cst_21 {dimension_numbers = #tpu.dot_dimension_numbers<[1], [0], [0], [1], [0, 0, 1, 1], [], []>} : vector<128x32xf32>, vector<32x96xf32>, vector<128x96xf32> -> vector<128x96xf32>
      %c0_22 = arith.constant 0 : index
      %c0_23 = arith.constant 0 : index
      %50 = vector.load %arg6[%c0_22, %c0_23] : memref<128x96xf32, #tpu.memory_space<vmem>>, vector<128x96xf32>
      tpu.vector_store %arg6[%c0_22, %c0_23], %49 {strides = array<i32>} : memref<128x96xf32, #tpu.memory_space<vmem>>, vector<128x96xf32>,
    } else {
    }
    %c0 = arith.constant 0 : index
    %c0_1 = arith.constant 0 : index
    %3 = vector.load %arg5[%c0, %c0_1] : memref<16x32xf32, #tpu.memory_space<vmem>>, vector<16x32xf32>
    %c32 = arith.constant 32 : index
    %c0_2 = arith.constant 0 : index
    %4 = vector.load %arg3[%c32, %c0_2] : memref<80x96xf32, #tpu.memory_space<vmem>>, vector<32x96xf32>
    %c64 = arith.constant 64 : index
    %c0_3 = arith.constant 0 : index
    %5 = vector.load %arg3[%c64, %c0_3] : memref<80x96xf32, #tpu.memory_space<vmem>>, vector<16x96xf32>
    %c16_i32 = arith.constant 16 : i32
    %6 = arith.muli %arg0, %c16_i32 : i32
    %7 = tpu.assume_multiple %6, 16 : i32
    %8 = arith.index_cast %7 : i32 to index
    %c0_4 = arith.constant 0 : index
    %9 = vector.load %arg6[%8, %c0_4] : memref<128x96xf32, #tpu.memory_space<vmem>>, vector<16x96xf32>
    %10 = arith.addf %9, %5 : vector<16x96xf32>
    %11 = vector.extract_strided_slice %4 {offsets = [0, 0], sizes = [32, 64], strides = [1, 1]} : vector<32x96xf32> to vector<32x64xf32>
    %cst = arith.constant dense<0.000000e+00> : vector<16x64xf32>
    %12 = tpu.matmul %3, %11, %cst {dimension_numbers = #tpu.dot_dimension_numbers<[1], [0], [0], [1], [0, 0, 1, 1], [], []>} : vector<16x32xf32>, vector<32x64xf32>, vector<16x64xf32> -> vector<16x64xf32>
    %13 = vector.extract_strided_slice %10 {offsets = [0, 0], sizes = [16, 32], strides = [1, 1]} : vector<16x96xf32> to vector<16x32xf32>
    %14 = vector.extract_strided_slice %12 {offsets = [0, 0], sizes = [16, 32], strides = [1, 1]} : vector<16x64xf32> to vector<16x32xf32>
    %15 = arith.addf %13, %14 : vector<16x32xf32>
    %16 = arith.negf %15 : vector<16x32xf32>
    %17 = math.exp %16 : vector<16x32xf32>
    %cst_5 = arith.constant 1.000000e+00 : f32
    %18 = vector.broadcast %cst_5 : f32 to vector<16x32xf32>
    %19 = arith.addf %18, %17 : vector<16x32xf32>
    %20 = arith.divf %18, %19 : vector<16x32xf32>
    %21 = vector.extract_strided_slice %10 {offsets = [0, 32], sizes = [16, 32], strides = [1, 1]} : vector<16x96xf32> to vector<16x32xf32>
    %22 = vector.extract_strided_slice %12 {offsets = [0, 32], sizes = [16, 32], strides = [1, 1]} : vector<16x64xf32> to vector<16x32xf32>
    %23 = arith.addf %21, %22 : vector<16x32xf32>
    %24 = arith.negf %23 : vector<16x32xf32>
    %25 = math.exp %24 : vector<16x32xf32>
    %cst_6 = arith.constant 1.000000e+00 : f32
    %26 = vector.broadcast %cst_6 : f32 to vector<16x32xf32>
    %27 = arith.addf %26, %25 : vector<16x32xf32>
    %28 = arith.divf %26, %27 : vector<16x32xf32>
    %29 = arith.mulf %28, %3 : vector<16x32xf32>
    %30 = vector.extract_strided_slice %10 {offsets = [0, 64], sizes = [16, 32], strides = [1, 1]} : vector<16x96xf32> to vector<16x32xf32>
    %31 = vector.extract_strided_slice %4 {offsets = [0, 64], sizes = [32, 32], strides = [1, 1]} : vector<32x96xf32> to vector<32x32xf32>
    %cst_7 = arith.constant dense<0.000000e+00> : vector<16x32xf32>
    %32 = tpu.matmul %29, %31, %cst_7 {dimension_numbers = #tpu.dot_dimension_numbers<[1], [0], [0], [1], [0, 0, 1, 1], [], []>} : vector<16x32xf32>, vector<32x32xf32>, vector<16x32xf32> -> vector<16x32xf32>
    %33 = arith.addf %30, %32 : vector<16x32xf32>
    %34 = math.tanh %33 : vector<16x32xf32>
    %cst_8 = arith.constant 1.000000e+00 : f32
    %35 = vector.broadcast %cst_8 : f32 to vector<16x32xf32>
    %36 = arith.subf %35, %20 : vector<16x32xf32>
    %37 = arith.mulf %36, %3 : vector<16x32xf32>
    %38 = arith.mulf %20, %34 : vector<16x32xf32>
    %39 = arith.addf %37, %38 : vector<16x32xf32>
    %c0_9 = arith.constant 0 : index
    %c0_10 = arith.constant 0 : index
    %40 = vector.load %arg5[%c0_9, %c0_10] : memref<16x32xf32, #tpu.memory_space<vmem>>, vector<16x32xf32>
    tpu.vector_store %arg5[%c0_9, %c0_10], %39 {strides = array<i32>} : memref<16x32xf32, #tpu.memory_space<vmem>>, vector<16x32xf32>,
    %41 = arith.index_cast %arg0 : i32 to index
    %c0_11 = arith.constant 0 : index
    %c0_12 = arith.constant 0 : index
    %42 = vector.load %arg4[%41, %c0_11, %c0_12] : memref<8x16x32xf32, #tpu.memory_space<vmem>>, vector<1x16x32xf32>
    %43 = vector.shape_cast %42 : vector<1x16x32xf32> to vector<16x32xf32>
    %44 = vector.shape_cast %39 : vector<16x32xf32> to vector<1x16x32xf32>
    tpu.vector_store %arg4[%41, %c0_11, %c0_12], %44 {strides = array<i32>} : memref<8x16x32xf32, #tpu.memory_space<vmem>>, vector<1x16x32xf32>,
    return
  }
  func.func @transform_0(%arg0: i32) -> (i32, i32) {
    %c0_i32 = arith.constant 0 : i32
    %c0_i32_0 = arith.constant 0 : i32
    %c0_i32_1 = arith.constant 0 : i32
    return %c0_i32, %c0_i32_0 : i32, i32
  }
  func.func @transform_1(%arg0: i32) -> (i32, i32) {
    %c0_i32 = arith.constant 0 : i32
    %c0_i32_0 = arith.constant 0 : i32
    %c0_i32_1 = arith.constant 0 : i32
    return %c0_i32, %c0_i32_0 : i32, i32
  }
  func.func @transform_2(%arg0: i32) -> (i32, i32) {
    %c0_i32 = arith.constant 0 : i32
    %c0_i32_0 = arith.constant 0 : i32
    %c0_i32_1 = arith.constant 0 : i32
    return %c0_i32, %c0_i32_0 : i32, i32
  }
  func.func @transform_3(%arg0: i32) -> (i32, i32, i32) {
    %c0_i32 = arith.constant 0 : i32
    %c0_i32_0 = arith.constant 0 : i32
    %c0_i32_1 = arith.constant 0 : i32
    %c0_i32_2 = arith.constant 0 : i32
    return %c0_i32, %c0_i32_0, %c0_i32_1 : i32, i32, i32
  }
}

</mosaic_0001>

<llo_original>
// kernel: mat_gru_cell_seq.1
$region0: #{mat_gru_cell_seq.1}
  #allocation0 [shape = 'u32[]', space=smem, size = 0x4, offset = 0x4, fixed_abs, tag = 'smem constant byte address 0x4 - core index']
  #allocation1 [shape = 'u32[72,128]{1,0:T(1,128)}', space=vmem, size = 0x9000, scoped, tag = 'internal scratch']
  #allocation2 [shape = 'f32[16,32]{1,0:T(8,128)}', space=vmem, size = 0x2000, scoped, tag = 'scratch operand']
  #allocation3 [shape = 'f32[128,96]{1,0:T(8,128)}', space=vmem, size = 0x10000, scoped, tag = 'scratch operand']
  %s0 = inlined_call_operand.hbm [shape: f32[128,32], index: 0, kind: input, shape index: {}]
  %s1 = inlined_call_operand.hbm [shape: f32[16,32], index: 1, kind: input, shape index: {}]
  %s2 = inlined_call_operand.hbm [shape: f32[80,96], index: 2, kind: input, shape index: {}]
  %s3 = inlined_call_operand.hbm [shape: f32[8,16,32], index: 3, kind: output, shape index: {}]
  %s4 = sld [smem:[#allocation0]]
  $region61: #{mat_gru_cell_seq.1} parent=0
    _
  %s6 = ssub.s32 1, %s4
  %s7 = scalar_select 0, %s6, %s4
  $region1: #{mat_gru_cell_seq.1} parent=0
    #allocation4 [shape = 'u8[65536]{0}', space=vmem, size = 0x10000, scoped, tag = 'input window, operand 0, single buffered']
    #allocation5 [shape = 's32[2]{0}', space=sflag, size = 0x8, scoped, tag = 'scoped memory for mat_gru_cell_seq.1']
    #allocation6 [shape = 's32[2]{0}', space=sflag, size = 0x8, scoped, tag = 'scoped memory for mat_gru_cell_seq.1']
    #allocation7 [shape = 'u8[8192]{0}', space=vmem, size = 0x2000, scoped, tag = 'input window, operand 1, single buffered']
    #allocation8 [shape = 's32[1]{0}', space=sflag, size = 0x4, scoped, tag = 'scoped memory for mat_gru_cell_seq.1']
    #allocation9 [shape = 'u8[40960]{0}', space=vmem, size = 0xa000, scoped, tag = 'input window, operand 2, single buffered']
    #allocation10 [shape = 'u8[65536]{0}', space=vmem, size = 0x10000, scoped, tag = 'output window, operand 0, single buffered']
    %8 = vsyncpa [#allocation5], 0
    %9 = vsyncpa [#allocation8], 0
    %10 = vsyncpa [#allocation6], 0
    loop: start=0, step=1, limit=10
    $region2: #{mat_gru_cell_seq.1} parent=1 // loop_pre_header
      _
    $region3: #{mat_gru_cell_seq.1} parent=1 // loop_header
      %s12 = sphi 0, %s16
      %p13 = scmp.ge.s32.totalorder %s12, 10
      %s20 = sphi 0, %s20
      %s22 = sphi 0, %s20
      %s23 = sphi 0, %s22
      %s37 = sphi 0, %s23
      %s41 = sphi 0, %s41
      %s43 = sphi 0, %s41
      %s44 = sphi 0, %s43
      %s58 = sphi 0, %s44
      %s62 = sphi 0, %s62
      %s64 = sphi 0, %s62
      %s65 = sphi 0, %s64
      %s79 = sphi 0, %s65
      %s83 = sphi 0, %s83
      %s85 = sphi 0, %s83
      %s86 = sphi 0, %s85
      %s100 = sphi 0, %s86
    $region4: #{mat_gru_cell_seq.1} parent=1 // loop_header_branch
      %15 = sbr.rel (%p13) target = $region8
    $region5: #{mat_gru_cell_seq.1} parent=1 // loop_body
      %s17 = ssub.s32 %s12, 1
      %s18 = ssub.s32 %s12, 2
      %s19 = sadd.s32 %s12, 1
      %s21 = sadd.s32 %s20, 1
      %p24 = scmp.eq.s32.totalorder %s12, 7
      %p25 = scmp.ne.s32.totalorder %s20, %s22
      %p26 = scmp.eq.s32.totalorder %s12, 0
      %p27 = por %p25, %p26
      %p28 = scmp.ne.s32.totalorder %s20, %s22
      %p29 = scmp.eq.s32.totalorder %s17, 7
      %p30 = por %p28, %p29
      %p31 = scmp.ne.s32.totalorder %s22, %s23
      %p32 = scmp.eq.s32.totalorder %s17, 0
      %p33 = por %p31, %p32
      %p34 = scmp.ne.s32.totalorder %s22, %s23
      %p35 = scmp.eq.s32.totalorder %s18, 7
      %p36 = por %p34, %p35
      %p38 = scmp.ne.s32.totalorder %s23, %s37
      %p39 = scmp.eq.s32.totalorder %s18, 0
      %p40 = por %p38, %p39
      %s42 = sadd.s32 %s41, 1
      %p45 = scmp.eq.s32.totalorder %s12, 7
      %p46 = scmp.ne.s32.totalorder %s41, %s43
      %p47 = scmp.eq.s32.totalorder %s12, 0
      %p48 = por %p46, %p47
      %p49 = scmp.ne.s32.totalorder %s41, %s43
      %p50 = scmp.eq.s32.totalorder %s17, 7
      %p51 = por %p49, %p50
      %p52 = scmp.ne.s32.totalorder %s43, %s44
      %p53 = scmp.eq.s32.totalorder %s17, 0
      %p54 = por %p52, %p53
      %p55 = scmp.ne.s32.totalorder %s43, %s44
      %p56 = scmp.eq.s32.totalorder %s18, 7
      %p57 = por %p55, %p56
      %p59 = scmp.ne.s32.totalorder %s44, %s58
      %p60 = scmp.eq.s32.totalorder %s18, 0
      %p61 = por %p59, %p60
      %s63 = sadd.s32 %s62, 1
      %p66 = scmp.eq.s32.totalorder %s12, 7
      %p67 = scmp.ne.s32.totalorder %s62, %s64
      %p68 = scmp.eq.s32.totalorder %s12, 0
      %p69 = por %p67, %p68
      %p70 = scmp.ne.s32.totalorder %s62, %s64
      %p71 = scmp.eq.s32.totalorder %s17, 7
      %p72 = por %p70, %p71
      %p73 = scmp.ne.s32.totalorder %s64, %s65
      %p74 = scmp.eq.s32.totalorder %s17, 0
      %p75 = por %p73, %p74
      %p76 = scmp.ne.s32.totalorder %s64, %s65
      %p77 = scmp.eq.s32.totalorder %s18, 7
      %p78 = por %p76, %p77
      %p80 = scmp.ne.s32.totalorder %s65, %s79
      %p81 = scmp.eq.s32.totalorder %s18, 0
      %p82 = por %p80, %p81
      %s84 = sadd.s32 %s83, 1
      %p87 = scmp.eq.s32.totalorder %s12, 7
      %p88 = scmp.ne.s32.totalorder %s83, %s85
      %p89 = scmp.eq.s32.totalorder %s12, 0
      %p90 = por %p88, %p89
      %p91 = scmp.ne.s32.totalorder %s83, %s85
      %p92 = scmp.eq.s32.totalorder %s17, 7
      %p93 = por %p91, %p92
      %p94 = scmp.ne.s32.totalorder %s85, %s86
      %p95 = scmp.eq.s32.totalorder %s17, 0
      %p96 = por %p94, %p95
      %p97 = scmp.ne.s32.totalorder %s85, %s86
      %p98 = scmp.eq.s32.totalorder %s18, 7
      %p99 = por %p97, %p98
      %p101 = scmp.ne.s32.totalorder %s86, %s100
      %p102 = scmp.eq.s32.totalorder %s18, 0
      %p103 = por %p101, %p102
      %p104 = scmp.le.s32.totalorder 1, %s12
      %p105 = scmp.lt.s32.totalorder %s12, 9
      %p106 = pnand %p104, %p105
      %p107 = pneg %p106
      // Predicated region
      $region9: #{mat_gru_cell_seq.1} parent=5 // pred_check
        _
      $region10: #{mat_gru_cell_seq.1} parent=5 // pred_check_branch
        %109 = sbr.rel (%p106) target = $region12
      $region11: #{mat_gru_cell_seq.1} parent=5 // pred_region
        %s110 = ssub.s32 %s12, 1
        // Predicated region
        $region13: #{mat_gru_cell_seq.1} parent=11 // pred_check
          %p111 = pneg %p33
        $region14: #{mat_gru_cell_seq.1} parent=11 // pred_check_branch
          %113 = sbr.rel (%p111) target = $region16
        $region15: #{mat_gru_cell_seq.1} parent=11 // pred_region
          %115 = vsyncadd [#allocation5], 0
          %s116 = sshll.u32 %s0, 4
          %s117 = int_to_ptr.hbm [resolvable:$true] %s116
          %s118 = sshll.u32 [#allocation4], 4
          %s119 = int_to_ptr.vmem [resolvable:$true] %s118
          %124 = dma.hbm_to_vmem [thread:$0]  %s117, 2048, %s119, [#allocation5], 128, 128, 8
        $region16: #{mat_gru_cell_seq.1} parent=11 // pred_fallthru
          _
        // Predicated region
        $region17: #{mat_gru_cell_seq.1} parent=11 // pred_check
          %p125 = pneg %p54
        $region18: #{mat_gru_cell_seq.1} parent=11 // pred_check_branch
          %127 = sbr.rel (%p125) target = $region20
        $region19: #{mat_gru_cell_seq.1} parent=11 // pred_region
          %129 = vsyncadd [#allocation8], 0
          %s130 = sshll.u32 %s1, 4
          %s131 = int_to_ptr.hbm [resolvable:$true] %s130
          %s132 = sshll.u32 [#allocation7], 4
          %s133 = int_to_ptr.vmem [resolvable:$true] %s132
          %138 = dma.hbm_to_vmem [thread:$0]  %s131, 256, %s133, [#allocation8], 128, 128, 8
        $region20: #{mat_gru_cell_seq.1} parent=11 // pred_fallthru
          _
        // Predicated region
        $region21: #{mat_gru_cell_seq.1} parent=11 // pred_check
          %p139 = pneg %p75
        $region22: #{mat_gru_cell_seq.1} parent=11 // pred_check_branch
          %141 = sbr.rel (%p139) target = $region24
        $region23: #{mat_gru_cell_seq.1} parent=11 // pred_region
          %143 = vsyncadd [#allocation8], 0
          %s144 = sshll.u32 %s2, 4
          %s145 = int_to_ptr.hbm [resolvable:$true] %s144
          %s146 = sshll.u32 [#allocation9], 4
          %s147 = int_to_ptr.vmem [resolvable:$true] %s146
          %152 = dma.hbm_to_vmem [thread:$0]  %s145, 1280, %s147, [#allocation8], 128, 128, 8
        $region24: #{mat_gru_cell_seq.1} parent=11 // pred_fallthru
          _
      $region12: #{mat_gru_cell_seq.1} parent=5 // pred_fallthru
        _
      %p153 = scmp.lt.s32.totalorder %s12, 8
      // Predicated region
      $region25: #{mat_gru_cell_seq.1} parent=5 // pred_check
        %p154 = pneg %p153
      $region26: #{mat_gru_cell_seq.1} parent=5 // pred_check_branch
        %156 = sbr.rel (%p154) target = $region28
      $region27: #{mat_gru_cell_seq.1} parent=5 // pred_region
        _
      $region28: #{mat_gru_cell_seq.1} parent=5 // pred_fallthru
        _
      %p157 = scmp.le.s32.totalorder 1, %s12
      %p158 = scmp.lt.s32.totalorder %s12, 9
      %p159 = pnand %p157, %p158
      %p160 = pneg %p159
      // Predicated region
      $region29: #{mat_gru_cell_seq.1} parent=5 // pred_check
        _
      $region30: #{mat_gru_cell_seq.1} parent=5 // pred_check_branch
        %162 = sbr.rel (%p159) target = $region32
      $region31: #{mat_gru_cell_seq.1} parent=5 // pred_region
        %s163 = ssub.s32 %s12, 1
        // Predicated region
        $region33: #{mat_gru_cell_seq.1} parent=31 // pred_check
          %p164 = pneg %p33
        $region34: #{mat_gru_cell_seq.1} parent=31 // pred_check_branch
          %166 = sbr.rel (%p164) target = $region36
        $region35: #{mat_gru_cell_seq.1} parent=31 // pred_region
          %168 = dma.done [#allocation5], 2048
        $region36: #{mat_gru_cell_seq.1} parent=31 // pred_fallthru
          _
        // Predicated region
        $region37: #{mat_gru_cell_seq.1} parent=31 // pred_check
          %p169 = pneg %p54
        $region38: #{mat_gru_cell_seq.1} parent=31 // pred_check_branch
          %171 = sbr.rel (%p169) target = $region40
        $region39: #{mat_gru_cell_seq.1} parent=31 // pred_region
          %173 = dma.done [#allocation8], 256
        $region40: #{mat_gru_cell_seq.1} parent=31 // pred_fallthru
          _
        // Predicated region
        $region41: #{mat_gru_cell_seq.1} parent=31 // pred_check
          %p174 = pneg %p75
        $region42: #{mat_gru_cell_seq.1} parent=31 // pred_check_branch
          %176 = sbr.rel (%p174) target = $region44
        $region43: #{mat_gru_cell_seq.1} parent=31 // pred_region
          %178 = dma.done [#allocation8], 1280
        $region44: #{mat_gru_cell_seq.1} parent=31 // pred_fallthru
          _
        %p179 = pneg %p33
        %p180 = pneg %p30
        %p181 = pneg %p54
        %p182 = pneg %p51
        %p183 = pneg %p75
        %p184 = pneg %p72
        %p185 = pneg %p96
        %p186 = pneg %p93
        %p187 = scmp.eq.s32.totalorder %s17, 0
        // Predicated region
        $region45: #{mat_gru_cell_seq.1} parent=31 // pred_check
          %p188 = pneg %p187
        $region46: #{mat_gru_cell_seq.1} parent=31 // pred_check_branch
          %190 = sbr.rel (%p188) target = $region48
        $region47: #{mat_gru_cell_seq.1} parent=31 // pred_region
          %v191 = vld [vmem:[#allocation7] sm:$0xff]
          %v192 = vld [vmem:[#allocation7 + $0x8] sm:$0xff]
          %vm193 = vcmask 261120
          %194 = vst.msk [vmem:[#allocation2] sm:$0xff] %vm193, %v191
          %195 = vst.msk [vmem:[#allocation2 + $0x8] sm:$0xff] %vm193, %v192
          %v196 = vld [vmem:[#allocation9] sm:$0xff]
          %v197 = vld [vmem:[#allocation9 + $0x8] sm:$0xff]
          %v198 = vld [vmem:[#allocation9 + $0x10] sm:$0xff]
          %v199 = vld [vmem:[#allocation9 + $0x18] sm:$0xff]
          %v200 = vld [vmem:[#allocation4] sm:$0xff]
          %v201 = vld [vmem:[#allocation4 + $0x8] sm:$0xff]
          %v202 = vld [vmem:[#allocation4 + $0x10] sm:$0xff]
          %v203 = vld [vmem:[#allocation4 + $0x18] sm:$0xff]
          %v204 = vld [vmem:[#allocation4 + $0x20] sm:$0xff]
          %v205 = vld [vmem:[#allocation4 + $0x28] sm:$0xff]
          %v206 = vld [vmem:[#allocation4 + $0x30] sm:$0xff]
          %v207 = vld [vmem:[#allocation4 + $0x38] sm:$0xff]
          %v208 = vld [vmem:[#allocation4 + $0x40] sm:$0xff]
          %v209 = vld [vmem:[#allocation4 + $0x48] sm:$0xff]
          %v210 = vld [vmem:[#allocation4 + $0x50] sm:$0xff]
          %v211 = vld [vmem:[#allocation4 + $0x58] sm:$0xff]
          %v212 = vld [vmem:[#allocation4 + $0x60] sm:$0xff]
          %v213 = vld [vmem:[#allocation4 + $0x68] sm:$0xff]
          %v214 = vld [vmem:[#allocation4 + $0x70] sm:$0xff]
          %v215 = vld [vmem:[#allocation4 + $0x78] sm:$0xff]
          %v217 = vsel %vm193, %v200, 0
          %v220 = vsel %vm193, %v201, 0
          %v223 = vsel %vm193, %v202, 0
          %v226 = vsel %vm193, %v203, 0
          %v229 = vsel %vm193, %v204, 0
          %v232 = vsel %vm193, %v205, 0
          %v235 = vsel %vm193, %v206, 0
          %v238 = vsel %vm193, %v207, 0
          %v241 = vsel %vm193, %v208, 0
          %v244 = vsel %vm193, %v209, 0
          %v247 = vsel %vm193, %v210, 0
          %v250 = vsel %vm193, %v211, 0
          %v253 = vsel %vm193, %v212, 0
          %v256 = vsel %vm193, %v213, 0
          %v259 = vsel %vm193, %v214, 0
          %v262 = vsel %vm193, %v215, 0
          %264 = vmatpush.msra.mxu0 0.0
          %265 = vmatpush.msra.mxu0 0.0
          %266 = vmatpush.msra.mxu0 0.0
          %267 = vmatpush.msra.mxu0 0.0
          %268 = vmatpush.msra.mxu0 0.0
          %269 = vmatpush.msra.mxu0 0.0
          %270 = vmatpush.msra.mxu0 0.0
          %271 = vmatpush.msra.mxu0 0.0
          %272 = vmatpush.msra.mxu0 0.0
          %273 = vmatpush.msra.mxu0 0.0
          %274 = vmatpush.msra.mxu0 0.0
          %275 = vmatpush.msra.mxu0 0.0
          %276 = vmatpush.msra.mxu0 %v199
          %277 = vmatpush.msra.mxu0 %v198
          %278 = vmatpush.msra.mxu0 %v197
          %279 = vmatpush.msra.mxu0 %v196
          %280 = vmatmul.f32.gmra.mxu0 %v217
          %v281 = vpop.f32.mrf.mxu0
          %v282 = vadd.f32 0.0, %v281
          %283 = vmatmul.f32.gmra.mxu0 %v220
          %v284 = vpop.f32.mrf.mxu0
          %v285 = vadd.f32 0.0, %v284
          %286 = vmatmul.f32.gmra.mxu0 %v223
          %v287 = vpop.f32.mrf.mxu0
          %v288 = vadd.f32 0.0, %v287
          %289 = vmatmul.f32.gmra.mxu0 %v226
          %v290 = vpop.f32.mrf.mxu0
          %v291 = vadd.f32 0.0, %v290
          %292 = vmatmul.f32.gmra.mxu0 %v229
          %v293 = vpop.f32.mrf.mxu0
          %v294 = vadd.f32 0.0, %v293
          %295 = vmatmul.f32.gmra.mxu0 %v232
          %v296 = vpop.f32.mrf.mxu0
          %v297 = vadd.f32 0.0, %v296
          %298 = vmatmul.f32.gmra.mxu0 %v235
          %v299 = vpop.f32.mrf.mxu0
          %v300 = vadd.f32 0.0, %v299
          %301 = vmatmul.f32.gmra.mxu0 %v238
          %v302 = vpop.f32.mrf.mxu0
          %v303 = vadd.f32 0.0, %v302
          %304 = vmatmul.f32.gmra.mxu0 %v241
          %v305 = vpop.f32.mrf.mxu0
          %v306 = vadd.f32 0.0, %v305
          %307 = vmatmul.f32.gmra.mxu0 %v244
          %v308 = vpop.f32.mrf.mxu0
          %v309 = vadd.f32 0.0, %v308
          %310 = vmatmul.f32.gmra.mxu0 %v247
          %v311 = vpop.f32.mrf.mxu0
          %v312 = vadd.f32 0.0, %v311
          %313 = vmatmul.f32.gmra.mxu0 %v250
          %v314 = vpop.f32.mrf.mxu0
          %v315 = vadd.f32 0.0, %v314
          %316 = vmatmul.f32.gmra.mxu0 %v253
          %v317 = vpop.f32.mrf.mxu0
          %v318 = vadd.f32 0.0, %v317
          %319 = vmatmul.f32.gmra.mxu0 %v256
          %v320 = vpop.f32.mrf.mxu0
          %v321 = vadd.f32 0.0, %v320
          %322 = vmatmul.f32.gmra.mxu0 %v259
          %v323 = vpop.f32.mrf.mxu0
          %v324 = vadd.f32 0.0, %v323
          %325 = vmatmul.f32.gmra.mxu0 %v262
          %v326 = vpop.f32.mrf.mxu0
          %v327 = vadd.f32 0.0, %v326
          %328 = vdwg.mxu0
          %vm329 = vcmask 785408
          %330 = vst.msk [vmem:[#allocation3] sm:$0xff] %vm329, %v282
          %331 = vst.msk [vmem:[#allocation3 + $0x8] sm:$0xff] %vm329, %v285
          %332 = vst.msk [vmem:[#allocation3 + $0x10] sm:$0xff] %vm329, %v288
          %333 = vst.msk [vmem:[#allocation3 + $0x18] sm:$0xff] %vm329, %v291
          %334 = vst.msk [vmem:[#allocation3 + $0x20] sm:$0xff] %vm329, %v294
          %335 = vst.msk [vmem:[#allocation3 + $0x28] sm:$0xff] %vm329, %v297
          %336 = vst.msk [vmem:[#allocation3 + $0x30] sm:$0xff] %vm329, %v300
          %337 = vst.msk [vmem:[#allocation3 + $0x38] sm:$0xff] %vm329, %v303
          %338 = vst.msk [vmem:[#allocation3 + $0x40] sm:$0xff] %vm329, %v306
          %339 = vst.msk [vmem:[#allocation3 + $0x48] sm:$0xff] %vm329, %v309
          %340 = vst.msk [vmem:[#allocation3 + $0x50] sm:$0xff] %vm329, %v312
          %341 = vst.msk [vmem:[#allocation3 + $0x58] sm:$0xff] %vm329, %v315
          %342 = vst.msk [vmem:[#allocation3 + $0x60] sm:$0xff] %vm329, %v318
          %343 = vst.msk [vmem:[#allocation3 + $0x68] sm:$0xff] %vm329, %v321
          %344 = vst.msk [vmem:[#allocation3 + $0x70] sm:$0xff] %vm329, %v324
          %345 = vst.msk [vmem:[#allocation3 + $0x78] sm:$0xff] %vm329, %v327
        $region48: #{mat_gru_cell_seq.1} parent=31 // pred_fallthru
          _
        %v346 = vld [vmem:[#allocation2] sm:$0xff]
        %v347 = vld [vmem:[#allocation2 + $0x8] sm:$0xff]
        %v348 = vld [vmem:[#allocation9 + $0x20] sm:$0xff]
        %v349 = vld [vmem:[#allocation9 + $0x28] sm:$0xff]
        %v350 = vld [vmem:[#allocation9 + $0x30] sm:$0xff]
        %v351 = vld [vmem:[#allocation9 + $0x38] sm:$0xff]
        %v352 = vld [vmem:[#allocation9 + $0x40] sm:$0xff]
        %v353 = vld [vmem:[#allocation9 + $0x48] sm:$0xff]
        %s354 = smul.u32 %s17, 16
        %s355 = scalar_lea.vmem [#allocation3], %s354
        %v356 = vld [vmem:[%s355] sm:$0xff]
        %v357 = vld [vmem:[%s355 + $0x8] sm:$0xff]
        %v358 = vadd.f32 %v356, %v352
        %v359 = vadd.f32 %v357, %v353
        %vm360 = vcmask 261120
        %v362 = vsel %vm360, %v346, 0
        %v365 = vsel %vm360, %v347, 0
        %367 = vmatpush.msra.mxu0 0.0
        %368 = vmatpush.msra.mxu0 0.0
        %369 = vmatpush.msra.mxu0 0.0
        %370 = vmatpush.msra.mxu0 0.0
        %371 = vmatpush.msra.mxu0 0.0
        %372 = vmatpush.msra.mxu0 0.0
        %373 = vmatpush.msra.mxu0 0.0
        %374 = vmatpush.msra.mxu0 0.0
        %375 = vmatpush.msra.mxu0 0.0
        %376 = vmatpush.msra.mxu0 0.0
        %377 = vmatpush.msra.mxu0 0.0
        %378 = vmatpush.msra.mxu0 0.0
        %379 = vmatpush.msra.mxu0 %v351
        %380 = vmatpush.msra.mxu0 %v350
        %381 = vmatpush.msra.mxu0 %v349
        %382 = vmatpush.msra.mxu0 %v348
        %383 = vmatmul.f32.gmra.mxu0 %v362
        %v384 = vpop.f32.mrf.mxu0
        %v385 = vadd.f32 0.0, %v384
        %386 = vmatmul.f32.gmra.mxu0 %v365
        %v387 = vpop.f32.mrf.mxu0
        %v388 = vadd.f32 0.0, %v387
        %389 = vdwg.mxu0
        %v390 = vadd.f32 %v358, %v385
        %v391 = vadd.f32 %v359, %v388
        %v392 = vxor.u32 %v390, 2147483648
        %v393 = vxor.u32 %v391, 2147483648
        %v394 = vmul.f32 %v392, 1.442695
        %v395 = vpow.pop %v394
        %v396 = vmul.f32 %v393, 1.442695
        %v397 = vpow.pop %v396
        %v398 = vadd.f32 %v395, 1.0
        %v399 = vadd.f32 %v397, 1.0
        %v400 = vrcp.pop %v398
        %v401 = vmul.f32 %v398, %v400
        %v402 = vsub.f32 1.0, %v401
        %v403 = vmul.f32 %v400, %v402
        %v404 = vadd.f32 %v400, %v403
        %vm405 = vweird.f32 %v398
        %vm406 = vweird.f32 %v400
        %vm407 = vmor %vm405, %vm406
        %v408 = vsel %vm407, %v400, %v404
        %v409 = vand.u32 2147483647, %v398
        %vm410 = vcmp.eq.f32.partialorder %v409, 8.507059e+37
        %v411 = vand.u32 %v398, 2147483648
        %v412 = vor.u32 1.1754944e-38, %v411
        %v413 = vsel %vm410, %v412, %v408
        %v414 = vmul.f32 1.0, %v413
        %v415 = vrcp.pop %v399
        %v416 = vmul.f32 %v399, %v415
        %v417 = vsub.f32 1.0, %v416
        %v418 = vmul.f32 %v415, %v417
        %v419 = vadd.f32 %v415, %v418
        %vm420 = vweird.f32 %v399
        %vm421 = vweird.f32 %v415
        %vm422 = vmor %vm420, %vm421
        %v423 = vsel %vm422, %v415, %v419
        %v424 = vand.u32 2147483647, %v399
        %vm425 = vcmp.eq.f32.partialorder %v424, 8.507059e+37
        %v426 = vand.u32 %v399, 2147483648
        %v427 = vor.u32 1.1754944e-38, %v426
        %v428 = vsel %vm425, %v427, %v423
        %v429 = vmul.f32 1.0, %v428
        %430 = vrot.lane.b32.xlu0 %v346, 32
        %v431 = vpop.permute.xlu0 %430
        %432 = vrot.lane.b32.xlu0 %v347, 32
        %v433 = vpop.permute.xlu0 %432
        %v436 = vmul.f32 %v414, %v431
        %v437 = vmul.f32 %v429, %v433
        %440 = vrot.lane.b32.xlu0 %v436, 96
        %v441 = vpop.permute.xlu0 %440
        %442 = vrot.lane.b32.xlu0 %v437, 96
        %v443 = vpop.permute.xlu0 %442
        %448 = vrot.lane.b32.xlu0 %v348, 64
        %v449 = vpop.permute.xlu0 %448
        %450 = vrot.lane.b32.xlu0 %v349, 64
        %v451 = vpop.permute.xlu0 %450
        %452 = vrot.lane.b32.xlu0 %v350, 64
        %v453 = vpop.permute.xlu0 %452
        %454 = vrot.lane.b32.xlu0 %v351, 64
        %v455 = vpop.permute.xlu0 %454
        %v460 = vsel %vm360, %v441, 0
        %v462 = vsel %vm360, %v443, 0
        %464 = vmatpush.msra.mxu0 0.0
        %465 = vmatpush.msra.mxu0 0.0
        %466 = vmatpush.msra.mxu0 0.0
        %467 = vmatpush.msra.mxu0 0.0
        %468 = vmatpush.msra.mxu0 0.0
        %469 = vmatpush.msra.mxu0 0.0
        %470 = vmatpush.msra.mxu0 0.0
        %471 = vmatpush.msra.mxu0 0.0
        %472 = vmatpush.msra.mxu0 0.0
        %473 = vmatpush.msra.mxu0 0.0
        %474 = vmatpush.msra.mxu0 0.0
        %475 = vmatpush.msra.mxu0 0.0
        %476 = vmatpush.msra.mxu0 %v455
        %477 = vmatpush.msra.mxu0 %v453
        %478 = vmatpush.msra.mxu0 %v451
        %479 = vmatpush.msra.mxu0 %v449
        %480 = vmatmul.f32.gmra.mxu0 %v460
        %v481 = vpop.f32.mrf.mxu0
        %v482 = vadd.f32 0.0, %v481
        %483 = vmatmul.f32.gmra.mxu0 %v462
        %v484 = vpop.f32.mrf.mxu0
        %v485 = vadd.f32 0.0, %v484
        %486 = vdwg.mxu0
        %489 = vrot.lane.b32.xlu0 %v482, 64
        %v490 = vpop.permute.xlu0 %489
        %491 = vrot.lane.b32.xlu0 %v485, 64
        %v492 = vpop.permute.xlu0 %491
        %v495 = vadd.f32 %v358, %v490
        %v496 = vadd.f32 %v359, %v492
        %v497 = vtanh.pop %v495
        %v498 = vtanh.pop %v496
        %v499 = vsub.f32 1.0, %v414
        %v500 = vsub.f32 1.0, %v429
        %v501 = vmul.f32 %v499, %v346
        %v502 = vmul.f32 %v500, %v347
        %505 = vrot.lane.b32.xlu0 %v497, 64
        %v506 = vpop.permute.xlu0 %505
        %507 = vrot.lane.b32.xlu0 %v498, 64
        %v508 = vpop.permute.xlu0 %507
        %v511 = vmul.f32 %v414, %v506
        %v512 = vmul.f32 %v429, %v508
        %v513 = vadd.f32 %v501, %v511
        %v514 = vadd.f32 %v502, %v512
        %515 = vst.msk [vmem:[#allocation2] sm:$0xff] %vm360, %v513
        %516 = vst.msk [vmem:[#allocation2 + $0x8] sm:$0xff] %vm360, %v514
        %s517 = scalar_lea.vmem [#allocation10], %s354
        %518 = vst.msk [vmem:[%s517] sm:$0xff] %vm360, %v513
        %519 = vst.msk [vmem:[%s517 + $0x8] sm:$0xff] %vm360, %v514
        // Predicated region
        $region49: #{mat_gru_cell_seq.1} parent=31 // pred_check
          %p520 = pneg %p93
        $region50: #{mat_gru_cell_seq.1} parent=31 // pred_check_branch
          %522 = sbr.rel (%p520) target = $region52
        $region51: #{mat_gru_cell_seq.1} parent=31 // pred_region
          %524 = vsyncadd [#allocation6], 0
          %s525 = sshll.u32 [#allocation10], 4
          %s526 = int_to_ptr.vmem [resolvable:$true] %s525
          %s527 = sshll.u32 %s3, 4
          %s528 = int_to_ptr.hbm [resolvable:$true] %s527
          %533 = dma.vmem_to_hbm [thread:$0]  %s526, 2048, %s528, [#allocation6], 128, 128, 8
        $region52: #{mat_gru_cell_seq.1} parent=31 // pred_fallthru
          _
        // Predicated region
        $region53: #{mat_gru_cell_seq.1} parent=31 // pred_check
          %p534 = pneg %p93
        $region54: #{mat_gru_cell_seq.1} parent=31 // pred_check_branch
          %536 = sbr.rel (%p534) target = $region56
        $region55: #{mat_gru_cell_seq.1} parent=31 // pred_region
          %538 = dma.done [#allocation6], 2048
        $region56: #{mat_gru_cell_seq.1} parent=31 // pred_fallthru
          _
      $region32: #{mat_gru_cell_seq.1} parent=5 // pred_fallthru
        _
      %p539 = scmp.le.s32.totalorder 2, %s12
      // Predicated region
      $region57: #{mat_gru_cell_seq.1} parent=5 // pred_check
        %p540 = pneg %p539
      $region58: #{mat_gru_cell_seq.1} parent=5 // pred_check_branch
        %542 = sbr.rel (%p540) target = $region60
      $region59: #{mat_gru_cell_seq.1} parent=5 // pred_region
        %s543 = ssub.s32 %s12, 2
      $region60: #{mat_gru_cell_seq.1} parent=5 // pred_fallthru
        _
    $region6: #{mat_gru_cell_seq.1} parent=1 // loop_footer
      %s16 = sadd.s32 1, %s12
    $region7: #{mat_gru_cell_seq.1} parent=1 // loop_footer_branch
      %11 = sbr.rel target = $region3
    $region8: #{mat_gru_cell_seq.1} parent=1 // loop_exit
      _
    %544 = vsyncpa [#allocation5], 1
    %s545 = scalar_lea.sflag [#allocation5], 1
    %546 = vsyncpa %s545, 1
    %547 = vsyncpa [#allocation8], 1
    %548 = vsyncpa [#allocation6], 1
    %s549 = scalar_lea.sflag [#allocation6], 1
    %550 = vsyncpa %s549, 1

</llo_original>
